<compile_context>
chip_gen: v7x
topology: tpu7x:2x2x1
jax: 0.10.0
libtpu: 0.0.40
codegen_flags: <defaults>
</compile_context>

<pallas_src>
import functools
import math

import jax
import jax.numpy as jnp
import numpy as np
from jax.experimental import pallas as pl
from jax.experimental.pallas import tpu as pltpu


def _round_up(x, m):
    return ((x + m - 1) // m) * m


# -----------------------------------------------------------------------------
# Kernel: one tile of TM rows -> termination logits stored as a (1, TM) row
# -----------------------------------------------------------------------------
def termination_decoder_kernel(
    x_ref,      # (TM, K)   pooled (or pool-folded) features
    w1_ref,     # (K, H)    backbone[0].weight^T (tiled N times for pool='sum')
    g1_ref,     # (1, H)    backbone[1] LayerNorm gamma
    b1_ref,     # (1, H)    backbone[1] LayerNorm beta
    w2_ref,     # (H, H)    backbone[3].weight^T (bias=False)
    g2_ref,     # (1, H)    backbone[4] LayerNorm gamma
    b2_ref,     # (1, H)    backbone[4] LayerNorm beta
    wh_ref,     # (1, H)    head[0].weight as a row
    bh_ref,     # (1, 1)    head[0].bias
    out_ref,    # (1, TM)   lane-dense output row
    *,
    ln_eps: float,
):
    x = x_ref[...].astype(jnp.float32)                       # (TM, K)

    def layernorm(z, gamma, beta):
        mu = jnp.mean(z, axis=-1, keepdims=True)
        c = z - mu
        var = jnp.mean(c * c, axis=-1, keepdims=True)
        return c * jax.lax.rsqrt(var + ln_eps) * gamma + beta

    h = jnp.dot(x, w1_ref[...], preferred_element_type=jnp.float32)   # MXU (TM, H)
    h = jnp.maximum(layernorm(h, g1_ref[...], b1_ref[...]), 0.0)
    h = jnp.dot(h, w2_ref[...], preferred_element_type=jnp.float32)   # MXU (TM, H)
    h = jnp.maximum(layernorm(h, g2_ref[...], b2_ref[...]), 0.0)

    # Head: VPU broadcast-multiply by the wh row + lane reduce, written as a
    # lane-dense (1, TM) row (no single-column MXU matmul, no (TM, 1) store).
    logit = jnp.sum(h * wh_ref[...], axis=-1)                 # (TM,)
    out_ref[...] = (logit[None, :] + bh_ref[...]).astype(out_ref.dtype)


# -----------------------------------------------------------------------------
# Wrapper
# -----------------------------------------------------------------------------
def termination_decoder_pallas(feat, params, *, pool="sum", ln_eps=1e-5):
    b, l, n, d_in = feat.shape
    m = b * l
    hid = params["w1"].shape[1]

    if pool == "transformer":
        # TODO(synk): rt_pool_type == 'transformer' (TransformerWithCLS /
        # nn.TransformerEncoderLayer pooling) is not implemented in this kernel.
        raise NotImplementedError("rt_pool_type='transformer' is not implemented")

    # ---- lane-dense 2D (M, K) input; the pool is folded away in the wrapper --
    if pool == "first":
        # Only token 0 is needed: slice in the wrapper so the kernel never
        # reads the unused N-1 tokens from HBM.
        x2d = feat[:, :, 0, :].reshape(m, d_in)
        w1_eff = params["w1"]                                  # (D_in, H)
    else:  # module's default (else) branch: sum over tokens
        # Fold sum-pool into the first matmul:
        #   reshape(M, N*D_in) @ vstack([w1]*N)  ==  feat.sum(-2) @ w1
        x2d = feat.reshape(m, n * d_in)                        # free, contiguous
        w1_eff = jnp.tile(params["w1"], (n, 1))                # (N*D_in, H), once, tiny
    k_dim = x2d.shape[1]
    wh_row = params["wh"].reshape(1, hid)                      # (1, H)

    # ---- row-tile size --------------------------------------------------------
    if m < 8:
        tm = m                                                 # full-extent block
    else:
        tm = min(512, (m // 8) * 8)                            # multiple of 8, <= m
        if m > 256 and pl.cdiv(m, tm) < 2:
            # keep >= 2 grid steps so both v7x TensorCores get work
            tm = _round_up(pl.cdiv(m, 2), 8)
    num_tiles = pl.cdiv(m, tm)   # ragged last block OK: all ops are row-wise and
                                 # the extra rows are sliced off below

    kern = functools.partial(termination_decoder_kernel, ln_eps=ln_eps)

    weight_args = (
        w1_eff, params["g1"], params["b1"],
        params["w2"], params["g2"], params["b2"],
        wh_row, params["bh"],
    )

    def weight_spec(w):
        return pl.BlockSpec(w.shape, lambda i: (0, 0))

    in_specs = [pl.BlockSpec((tm, k_dim), lambda i: (i, 0))] + [
        weight_spec(w) for w in weight_args
    ]
    out_specs = pl.BlockSpec((1, tm), lambda i: (i, 0))        # lane-dense row store

    out = pl.pallas_call(
        kern,
        out_shape=jax.ShapeDtypeStruct((num_tiles, tm), jnp.float32),
        grid=(num_tiles,),
        in_specs=in_specs,
        out_specs=out_specs,
        compiler_params=pltpu.CompilerParams(
            dimension_semantics=("parallel",)),
    )(x2d, *weight_args)

    return out.reshape(-1)[:m].reshape(b, l)


# -----------------------------------------------------------------------------
# Pure-JAX reference (mirrors the PyTorch forward exactly)
# -----------------------------------------------------------------------------
def termination_decoder_ref(feat, params, *, pool="sum", ln_eps=1e-5):
    if pool == "first":
        x = feat[:, :, 0, :]
    else:
        x = feat.sum(axis=-2)

    def ln(z, gamma, beta):
        m = jnp.mean(z, axis=-1, keepdims=True)
        c = z - m
        var = jnp.mean(c * c, axis=-1, keepdims=True)
        return c * jax.lax.rsqrt(var + ln_eps) * gamma + beta

    h = jnp.maximum(ln(x @ params["w1"], params["g1"], params["b1"]), 0.0)
    h = jnp.maximum(ln(h @ params["w2"], params["g2"], params["b2"]), 0.0)
    out = h @ params["wh"] + params["bh"]
    return out[..., 0]


# -----------------------------------------------------------------------------
# Deterministic parameter init (shapes from TerminationDecoder.__init__)
# -----------------------------------------------------------------------------
def init_params(key, input_dim, hidden_dim):
    k1, k2, k3, k4, k5, k6, k7, k8 = jax.random.split(key, 8)

    def linear_w(k, fan_in, fan_out):
        bound = 1.0 / math.sqrt(fan_in)
        return jax.random.uniform(k, (fan_in, fan_out), jnp.float32, -bound, bound)

    hb = 1.0 / math.sqrt(hidden_dim)
    # LN affine params are NOT assumed identity (checkpoint-faithful): perturb.
    return {
        "w1": linear_w(k1, input_dim, hidden_dim),           # backbone[0].weight^T
        "g1": 1.0 + 0.1 * jax.random.normal(k2, (1, hidden_dim), jnp.float32),
        "b1": 0.1 * jax.random.normal(k3, (1, hidden_dim), jnp.float32),
        "w2": linear_w(k4, hidden_dim, hidden_dim),           # backbone[3].weight^T
        "g2": 1.0 + 0.1 * jax.random.normal(k5, (1, hidden_dim), jnp.float32),
        "b2": 0.1 * jax.random.normal(k6, (1, hidden_dim), jnp.float32),
        "wh": linear_w(k7, hidden_dim, 1),                    # head[0].weight^T
        "bh": jax.random.uniform(k8, (1, 1), jnp.float32, -hb, hb),
    }


if __name__ == "__main__":
    # Small shapes consistent with the module's forward: feat is (B, L, N, D_in).
    B, L, N, D_IN, HID = 2, 8, 6, 64, 32

    key = jax.random.PRNGKey(0)
    kp, kx = jax.random.split(key)
    params = init_params(kp, D_IN, HID)
    feat = jax.random.normal(kx, (B, L, N, D_IN), jnp.float32)

    # Tolerance note: the kernel folds the sum-pool into the first matmul, so
    # f32 accumulation order differs slightly from the reference.
    TOL = dict(rtol=1e-4, atol=1e-5)

    # Default 'sum' (the module's else branch).
    out = termination_decoder_pallas(feat, params, pool="sum")
    jax.block_until_ready(out)
    assert out.shape == (B, L)
    ref = termination_decoder_ref(feat, params, pool="sum")
    np.testing.assert_allclose(np.asarray(out), np.asarray(ref), **TOL)

    # 'first' pooling path (only token 0 ever reaches the kernel).
    out_f = termination_decoder_pallas(feat, params, pool="first")
    jax.block_until_ready(out_f)
    ref_f = termination_decoder_ref(feat, params, pool="first")
    np.testing.assert_allclose(np.asarray(out_f), np.asarray(ref_f), **TOL)

    # Ragged-grid path: M not divisible by TM (multi-tile, partial last block,
    # lane-dense multi-row output) — exercises the no-jnp.pad strategy.
    feat_r = jax.random.normal(jax.random.PRNGKey(1), (2, 9, N, D_IN), jnp.float32)
    out_r = termination_decoder_pallas(feat_r, params, pool="sum")
    jax.block_until_ready(out_r)
    ref_r = termination_decoder_ref(feat_r, params, pool="sum")
    np.testing.assert_allclose(np.asarray(out_r), np.asarray(ref_r), **TOL)

    print("KERNEL_OK")
</pallas_src>

<mosaic_0001>
module attributes {stable_mosaic.version = 11 : i64} {
  func.func @termination_decoder_kernel(%arg0: i32, %arg1: memref<16x384xf32, #tpu.memory_space<vmem>>, %arg2: memref<384x32xf32, #tpu.memory_space<vmem>>, %arg3: memref<1x32xf32, #tpu.memory_space<vmem>>, %arg4: memref<1x32xf32, #tpu.memory_space<vmem>>, %arg5: memref<32x32xf32, #tpu.memory_space<vmem>>, %arg6: memref<1x32xf32, #tpu.memory_space<vmem>>, %arg7: memref<1x32xf32, #tpu.memory_space<vmem>>, %arg8: memref<1x32xf32, #tpu.memory_space<vmem>>, %arg9: memref<1x1xf32, #tpu.memory_space<vmem>>, %arg10: memref<1x16xf32, #tpu.memory_space<vmem>>) attributes {dimension_semantics = [#tpu.dimension_semantics<parallel>], iteration_bounds = array<i64: 1>, scalar_prefetch = 0 : i64, scratch_operands = 0 : i64, tpu.core_type = #tpu.core_type<tc>, window_params = [{transform_indices = @transform_0, window_bounds = array<i64: 16, 384>}, {pipeline_mode = #tpu.pipeline_mode<synchronous>, transform_indices = @transform_1, window_bounds = array<i64: 384, 32>}, {pipeline_mode = #tpu.pipeline_mode<synchronous>, transform_indices = @transform_2, window_bounds = array<i64: 1, 32>}, {pipeline_mode = #tpu.pipeline_mode<synchronous>, transform_indices = @transform_3, window_bounds = array<i64: 1, 32>}, {pipeline_mode = #tpu.pipeline_mode<synchronous>, transform_indices = @transform_4, window_bounds = array<i64: 32, 32>}, {pipeline_mode = #tpu.pipeline_mode<synchronous>, transform_indices = @transform_5, window_bounds = array<i64: 1, 32>}, {pipeline_mode = #tpu.pipeline_mode<synchronous>, transform_indices = @transform_6, window_bounds = array<i64: 1, 32>}, {pipeline_mode = #tpu.pipeline_mode<synchronous>, transform_indices = @transform_7, window_bounds = array<i64: 1, 32>}, {pipeline_mode = #tpu.pipeline_mode<synchronous>, transform_indices = @transform_8, window_bounds = array<i64: 1, 1>}, {transform_indices = @transform_9, window_bounds = array<i64: 1, 16>}]} {
    %c0 = arith.constant 0 : index
    %c0_0 = arith.constant 0 : index
    %0 = vector.load %arg1[%c0, %c0_0] : memref<16x384xf32, #tpu.memory_space<vmem>>, vector<16x384xf32>
    %c0_1 = arith.constant 0 : index
    %c0_2 = arith.constant 0 : index
    %1 = vector.load %arg2[%c0_1, %c0_2] : memref<384x32xf32, #tpu.memory_space<vmem>>, vector<384x32xf32>
    %cst = arith.constant dense<0.000000e+00> : vector<16x32xf32>
    %2 = tpu.matmul %0, %1, %cst {dimension_numbers = #tpu.dot_dimension_numbers<[1], [0], [0], [1], [0, 0, 1, 1], [], []>} : vector<16x384xf32>, vector<384x32xf32>, vector<16x32xf32> -> vector<16x32xf32>
    %c0_3 = arith.constant 0 : index
    %c0_4 = arith.constant 0 : index
    %3 = vector.load %arg3[%c0_3, %c0_4] : memref<1x32xf32, #tpu.memory_space<vmem>>, vector<1x32xf32>
    %c0_5 = arith.constant 0 : index
    %c0_6 = arith.constant 0 : index
    %4 = vector.load %arg4[%c0_5, %c0_6] : memref<1x32xf32, #tpu.memory_space<vmem>>, vector<1x32xf32>
    %cst_7 = arith.constant dense<0.000000e+00> : vector<16xf32>
    %5 = vector.multi_reduction <add>, %2, %cst_7 [1] : vector<16x32xf32> to vector<16xf32>
    %6 = vector.shape_cast %5 : vector<16xf32> to vector<16x1xf32>
    %cst_8 = arith.constant 3.200000e+01 : f32
    %7 = vector.broadcast %cst_8 : f32 to vector<16x1xf32>
    %8 = arith.divf %6, %7 : vector<16x1xf32>
    %9 = vector.broadcast %8 : vector<16x1xf32> to vector<16x32xf32>
    %10 = arith.subf %2, %9 : vector<16x32xf32>
    %11 = arith.mulf %10, %10 : vector<16x32xf32>
    %cst_9 = arith.constant dense<0.000000e+00> : vector<16xf32>
    %12 = vector.multi_reduction <add>, %11, %cst_9 [1] : vector<16x32xf32> to vector<16xf32>
    %13 = vector.shape_cast %12 : vector<16xf32> to vector<16x1xf32>
    %cst_10 = arith.constant 3.200000e+01 : f32
    %14 = vector.broadcast %cst_10 : f32 to vector<16x1xf32>
    %15 = arith.divf %13, %14 : vector<16x1xf32>
    %cst_11 = arith.constant 9.99999974E-6 : f32
    %16 = vector.broadcast %cst_11 : f32 to vector<16x1xf32>
    %17 = arith.addf %15, %16 : vector<16x1xf32>
    %18 = math.rsqrt %17 : vector<16x1xf32>
    %19 = vector.broadcast %18 : vector<16x1xf32> to vector<16x32xf32>
    %20 = arith.mulf %10, %19 : vector<16x32xf32>
    %21 = vector.broadcast %3 : vector<1x32xf32> to vector<16x32xf32>
    %22 = arith.mulf %20, %21 : vector<16x32xf32>
    %23 = vector.broadcast %4 : vector<1x32xf32> to vector<16x32xf32>
    %24 = arith.addf %22, %23 : vector<16x32xf32>
    %cst_12 = arith.constant 0.000000e+00 : f32
    %25 = vector.broadcast %cst_12 : f32 to vector<16x32xf32>
    %26 = arith.maximumf %24, %25 : vector<16x32xf32>
    %c0_13 = arith.constant 0 : index
    %c0_14 = arith.constant 0 : index
    %27 = vector.load %arg5[%c0_13, %c0_14] : memref<32x32xf32, #tpu.memory_space<vmem>>, vector<32x32xf32>
    %cst_15 = arith.constant dense<0.000000e+00> : vector<16x32xf32>
    %28 = tpu.matmul %26, %27, %cst_15 {dimension_numbers = #tpu.dot_dimension_numbers<[1], [0], [0], [1], [0, 0, 1, 1], [], []>} : vector<16x32xf32>, vector<32x32xf32>, vector<16x32xf32> -> vector<16x32xf32>
    %c0_16 = arith.constant 0 : index
    %c0_17 = arith.constant 0 : index
    %29 = vector.load %arg6[%c0_16, %c0_17] : memref<1x32xf32, #tpu.memory_space<vmem>>, vector<1x32xf32>
    %c0_18 = arith.constant 0 : index
    %c0_19 = arith.constant 0 : index
    %30 = vector.load %arg7[%c0_18, %c0_19] : memref<1x32xf32, #tpu.memory_space<vmem>>, vector<1x32xf32>
    %cst_20 = arith.constant dense<0.000000e+00> : vector<16xf32>
    %31 = vector.multi_reduction <add>, %28, %cst_20 [1] : vector<16x32xf32> to vector<16xf32>
    %32 = vector.shape_cast %31 : vector<16xf32> to vector<16x1xf32>
    %cst_21 = arith.constant 3.200000e+01 : f32
    %33 = vector.broadcast %cst_21 : f32 to vector<16x1xf32>
    %34 = arith.divf %32, %33 : vector<16x1xf32>
    %35 = vector.broadcast %34 : vector<16x1xf32> to vector<16x32xf32>
    %36 = arith.subf %28, %35 : vector<16x32xf32>
    %37 = arith.mulf %36, %36 : vector<16x32xf32>
    %cst_22 = arith.constant dense<0.000000e+00> : vector<16xf32>
    %38 = vector.multi_reduction <add>, %37, %cst_22 [1] : vector<16x32xf32> to vector<16xf32>
    %39 = vector.shape_cast %38 : vector<16xf32> to vector<16x1xf32>
    %cst_23 = arith.constant 3.200000e+01 : f32
    %40 = vector.broadcast %cst_23 : f32 to vector<16x1xf32>
    %41 = arith.divf %39, %40 : vector<16x1xf32>
    %cst_24 = arith.constant 9.99999974E-6 : f32
    %42 = vector.broadcast %cst_24 : f32 to vector<16x1xf32>
    %43 = arith.addf %41, %42 : vector<16x1xf32>
    %44 = math.rsqrt %43 : vector<16x1xf32>
    %45 = vector.broadcast %44 : vector<16x1xf32> to vector<16x32xf32>
    %46 = arith.mulf %36, %45 : vector<16x32xf32>
    %47 = vector.broadcast %29 : vector<1x32xf32> to vector<16x32xf32>
    %48 = arith.mulf %46, %47 : vector<16x32xf32>
    %49 = vector.broadcast %30 : vector<1x32xf32> to vector<16x32xf32>
    %50 = arith.addf %48, %49 : vector<16x32xf32>
    %cst_25 = arith.constant 0.000000e+00 : f32
    %51 = vector.broadcast %cst_25 : f32 to vector<16x32xf32>
    %52 = arith.maximumf %50, %51 : vector<16x32xf32>
    %c0_26 = arith.constant 0 : index
    %c0_27 = arith.constant 0 : index
    %53 = vector.load %arg8[%c0_26, %c0_27] : memref<1x32xf32, #tpu.memory_space<vmem>>, vector<1x32xf32>
    %54 = vector.broadcast %53 : vector<1x32xf32> to vector<16x32xf32>
    %55 = arith.mulf %52, %54 : vector<16x32xf32>
    %cst_28 = arith.constant dense<0.000000e+00> : vector<16xf32>
    %56 = vector.multi_reduction <add>, %55, %cst_28 [1] : vector<16x32xf32> to vector<16xf32>
    %57 = vector.shape_cast %56 : vector<16xf32> to vector<1x16xf32>
    %c0_29 = arith.constant 0 : index
    %c0_30 = arith.constant 0 : index
    %58 = vector.load %arg9[%c0_29, %c0_30] : memref<1x1xf32, #tpu.memory_space<vmem>>, vector<1x1xf32>
    %59 = vector.broadcast %58 : vector<1x1xf32> to vector<1x16xf32>
    %60 = arith.addf %57, %59 : vector<1x16xf32>
    %c0_31 = arith.constant 0 : index
    %c0_32 = arith.constant 0 : index
    %61 = vector.load %arg10[%c0_31, %c0_32] : memref<1x16xf32, #tpu.memory_space<vmem>>, vector<1x16xf32>
    tpu.vector_store %arg10[%c0_31, %c0_32], %60 {strides = array<i32>} : memref<1x16xf32, #tpu.memory_space<vmem>>, vector<1x16xf32>,
    return
  }
  func.func @transform_0(%arg0: i32) -> (i32, i32) {
    %c0_i32 = arith.constant 0 : i32
    %c0_i32_0 = arith.constant 0 : i32
    return %arg0, %c0_i32 : i32, i32
  }
  func.func @transform_1(%arg0: i32) -> (i32, i32) {
    %c0_i32 = arith.constant 0 : i32
    %c0_i32_0 = arith.constant 0 : i32
    %c0_i32_1 = arith.constant 0 : i32
    return %c0_i32, %c0_i32_0 : i32, i32
  }
  func.func @transform_2(%arg0: i32) -> (i32, i32) {
    %c0_i32 = arith.constant 0 : i32
    %c0_i32_0 = arith.constant 0 : i32
    %c0_i32_1 = arith.constant 0 : i32
    return %c0_i32, %c0_i32_0 : i32, i32
  }
  func.func @transform_3(%arg0: i32) -> (i32, i32) {
    %c0_i32 = arith.constant 0 : i32
    %c0_i32_0 = arith.constant 0 : i32
    %c0_i32_1 = arith.constant 0 : i32
    return %c0_i32, %c0_i32_0 : i32, i32
  }
  func.func @transform_4(%arg0: i32) -> (i32, i32) {
    %c0_i32 = arith.constant 0 : i32
    %c0_i32_0 = arith.constant 0 : i32
    %c0_i32_1 = arith.constant 0 : i32
    return %c0_i32, %c0_i32_0 : i32, i32
  }
  func.func @transform_5(%arg0: i32) -> (i32, i32) {
    %c0_i32 = arith.constant 0 : i32
    %c0_i32_0 = arith.constant 0 : i32
    %c0_i32_1 = arith.constant 0 : i32
    return %c0_i32, %c0_i32_0 : i32, i32
  }
  func.func @transform_6(%arg0: i32) -> (i32, i32) {
    %c0_i32 = arith.constant 0 : i32
    %c0_i32_0 = arith.constant 0 : i32
    %c0_i32_1 = arith.constant 0 : i32
    return %c0_i32, %c0_i32_0 : i32, i32
  }
  func.func @transform_7(%arg0: i32) -> (i32, i32) {
    %c0_i32 = arith.constant 0 : i32
    %c0_i32_0 = arith.constant 0 : i32
    %c0_i32_1 = arith.constant 0 : i32
    return %c0_i32, %c0_i32_0 : i32, i32
  }
  func.func @transform_8(%arg0: i32) -> (i32, i32) {
    %c0_i32 = arith.constant 0 : i32
    %c0_i32_0 = arith.constant 0 : i32
    %c0_i32_1 = arith.constant 0 : i32
    return %c0_i32, %c0_i32_0 : i32, i32
  }
  func.func @transform_9(%arg0: i32) -> (i32, i32) {
    %c0_i32 = arith.constant 0 : i32
    %c0_i32_0 = arith.constant 0 : i32
    return %arg0, %c0_i32 : i32, i32
  }
}

</mosaic_0001>

<llo_original>
// kernel: tpu_custom_call.1
$region0: #{tpu_custom_call.1}
  #allocation0 [shape = 'u32[]', space=smem, size = 0x4, offset = 0x4, fixed_abs, tag = 'smem constant byte address 0x4 - core index']
  #allocation1 [shape = 'u32[144,128]{1,0:T(1,128)}', space=vmem, size = 0x12000, scoped, tag = 'internal scratch']
  #allocation2 [shape = 'f32[1,1]{1,0:T(1,128)S(1)}', space=vmem, size = 0x200, scoped, tag = 'scoped memory for tpu_custom_call.1']
  %s0 = inlined_call_operand.vmem [shape: f32[16,384], index: 0, kind: input, shape index: {}]
  %s1 = inlined_call_operand.vmem [shape: f32[384,32], index: 1, kind: input, shape index: {}]
  %s2 = inlined_call_operand.vmem [shape: f32[1,32], index: 2, kind: input, shape index: {}]
  %s3 = inlined_call_operand.vmem [shape: f32[1,32], index: 3, kind: input, shape index: {}]
  %s4 = inlined_call_operand.vmem [shape: f32[32,32], index: 4, kind: input, shape index: {}]
  %s5 = inlined_call_operand.vmem [shape: f32[1,32], index: 5, kind: input, shape index: {}]
  %s6 = inlined_call_operand.vmem [shape: f32[1,32], index: 6, kind: input, shape index: {}]
  %s7 = inlined_call_operand.vmem [shape: f32[1,32], index: 7, kind: input, shape index: {}]
  %s8 = inlined_call_operand.<no memory space> [shape: f32[1,1], index: 8, kind: input, shape index: {}]
  %s9 = inlined_call_operand.hbm [shape: f32[1,16], index: 9, kind: output, shape index: {}]
  %s10 = sld [smem:[#allocation0]]
  $region46: #{tpu_custom_call.1} parent=0
    _
  %s12 = ssub.s32 1, %s10
  %s13 = scalar_select 0, %s12, %s10
  %v14 = vstv %s8
  %15 = vst [vmem:[#allocation2] sm:$0x1] %v14
  $region1: #{tpu_custom_call.1} parent=0
    #allocation3 [shape = 'u8[512]{0}', space=vmem, size = 0x400, scoped, tag = 'output window, operand 0, single buffered']
    #allocation4 [shape = 's32[1]{0}', space=sflag, size = 0x4, scoped, tag = 'scoped memory for tpu_custom_call.1']
    %16 = vsyncpa [#allocation4], 0
    // Predicated region
    $region2: #{tpu_custom_call.1} parent=1 // pred_check
      _
    $region3: #{tpu_custom_call.1} parent=1 // pred_check_branch
      %18 = sbr.rel (0) target = $region5
    $region4: #{tpu_custom_call.1} parent=1 // pred_region
      _
    $region5: #{tpu_custom_call.1} parent=1 // pred_fallthru
      _
    // Predicated region
    $region6: #{tpu_custom_call.1} parent=1 // pred_check
      _
    $region7: #{tpu_custom_call.1} parent=1 // pred_check_branch
      %20 = sbr.rel (0) target = $region9
    $region8: #{tpu_custom_call.1} parent=1 // pred_region
      _
    $region9: #{tpu_custom_call.1} parent=1 // pred_fallthru
      _
    // Predicated region
    $region10: #{tpu_custom_call.1} parent=1 // pred_check
      _
    $region11: #{tpu_custom_call.1} parent=1 // pred_check_branch
      %22 = sbr.rel (0) target = $region13
    $region12: #{tpu_custom_call.1} parent=1 // pred_region
      _
    $region13: #{tpu_custom_call.1} parent=1 // pred_fallthru
      _
    // Predicated region
    $region14: #{tpu_custom_call.1} parent=1 // pred_check
      _
    $region15: #{tpu_custom_call.1} parent=1 // pred_check_branch
      %24 = sbr.rel (0) target = $region17
    $region16: #{tpu_custom_call.1} parent=1 // pred_region
      _
    $region17: #{tpu_custom_call.1} parent=1 // pred_fallthru
      _
    // Predicated region
    $region18: #{tpu_custom_call.1} parent=1 // pred_check
      _
    $region19: #{tpu_custom_call.1} parent=1 // pred_check_branch
      %26 = sbr.rel (0) target = $region21
    $region20: #{tpu_custom_call.1} parent=1 // pred_region
      _
    $region21: #{tpu_custom_call.1} parent=1 // pred_fallthru
      _
    // Predicated region
    $region22: #{tpu_custom_call.1} parent=1 // pred_check
      _
    $region23: #{tpu_custom_call.1} parent=1 // pred_check_branch
      %28 = sbr.rel (0) target = $region25
    $region24: #{tpu_custom_call.1} parent=1 // pred_region
      _
    $region25: #{tpu_custom_call.1} parent=1 // pred_fallthru
      _
    // Predicated region
    $region26: #{tpu_custom_call.1} parent=1 // pred_check
      _
    $region27: #{tpu_custom_call.1} parent=1 // pred_check_branch
      %30 = sbr.rel (0) target = $region29
    $region28: #{tpu_custom_call.1} parent=1 // pred_region
      _
    $region29: #{tpu_custom_call.1} parent=1 // pred_fallthru
      _
    // Predicated region
    $region30: #{tpu_custom_call.1} parent=1 // pred_check
      _
    $region31: #{tpu_custom_call.1} parent=1 // pred_check_branch
      %32 = sbr.rel (0) target = $region33
    $region32: #{tpu_custom_call.1} parent=1 // pred_region
      _
    $region33: #{tpu_custom_call.1} parent=1 // pred_fallthru
      _
    // Predicated region
    $region34: #{tpu_custom_call.1} parent=1 // pred_check
      _
    $region35: #{tpu_custom_call.1} parent=1 // pred_check_branch
      %34 = sbr.rel (0) target = $region37
    $region36: #{tpu_custom_call.1} parent=1 // pred_region
      _
    $region37: #{tpu_custom_call.1} parent=1 // pred_fallthru
      _
    %v35 = vld [vmem:[%s0] sm:$0xff]
    %v36 = vld [vmem:[%s0 + $0x8] sm:$0xff]
    %v37 = vld [vmem:[%s0 + $0x10] sm:$0xff]
    %v38 = vld [vmem:[%s0 + $0x18] sm:$0xff]
    %v39 = vld [vmem:[%s0 + $0x20] sm:$0xff]
    %v40 = vld [vmem:[%s0 + $0x28] sm:$0xff]
    %v41 = vld [vmem:[%s1] sm:$0xff]
    %v42 = vld [vmem:[%s1 + $0x8] sm:$0xff]
    %v43 = vld [vmem:[%s1 + $0x10] sm:$0xff]
    %v44 = vld [vmem:[%s1 + $0x18] sm:$0xff]
    %v45 = vld [vmem:[%s1 + $0x20] sm:$0xff]
    %v46 = vld [vmem:[%s1 + $0x28] sm:$0xff]
    %v47 = vld [vmem:[%s1 + $0x30] sm:$0xff]
    %v48 = vld [vmem:[%s1 + $0x38] sm:$0xff]
    %v49 = vld [vmem:[%s1 + $0x40] sm:$0xff]
    %v50 = vld [vmem:[%s1 + $0x48] sm:$0xff]
    %v51 = vld [vmem:[%s1 + $0x50] sm:$0xff]
    %v52 = vld [vmem:[%s1 + $0x58] sm:$0xff]
    %v53 = vld [vmem:[%s1 + $0x60] sm:$0xff]
    %v54 = vld [vmem:[%s1 + $0x68] sm:$0xff]
    %v55 = vld [vmem:[%s1 + $0x70] sm:$0xff]
    %v56 = vld [vmem:[%s1 + $0x78] sm:$0xff]
    %v57 = vld [vmem:[%s1 + $0x80] sm:$0xff]
    %v58 = vld [vmem:[%s1 + $0x88] sm:$0xff]
    %v59 = vld [vmem:[%s1 + $0x90] sm:$0xff]
    %v60 = vld [vmem:[%s1 + $0x98] sm:$0xff]
    %v61 = vld [vmem:[%s1 + $0xa0] sm:$0xff]
    %v62 = vld [vmem:[%s1 + $0xa8] sm:$0xff]
    %v63 = vld [vmem:[%s1 + $0xb0] sm:$0xff]
    %v64 = vld [vmem:[%s1 + $0xb8] sm:$0xff]
    %v65 = vld [vmem:[%s1 + $0xc0] sm:$0xff]
    %v66 = vld [vmem:[%s1 + $0xc8] sm:$0xff]
    %v67 = vld [vmem:[%s1 + $0xd0] sm:$0xff]
    %v68 = vld [vmem:[%s1 + $0xd8] sm:$0xff]
    %v69 = vld [vmem:[%s1 + $0xe0] sm:$0xff]
    %v70 = vld [vmem:[%s1 + $0xe8] sm:$0xff]
    %v71 = vld [vmem:[%s1 + $0xf0] sm:$0xff]
    %v72 = vld [vmem:[%s1 + $0xf8] sm:$0xff]
    %v73 = vld [vmem:[%s1 + $0x100] sm:$0xff]
    %v74 = vld [vmem:[%s1 + $0x108] sm:$0xff]
    %v75 = vld [vmem:[%s1 + $0x110] sm:$0xff]
    %v76 = vld [vmem:[%s1 + $0x118] sm:$0xff]
    %v77 = vld [vmem:[%s1 + $0x120] sm:$0xff]
    %v78 = vld [vmem:[%s1 + $0x128] sm:$0xff]
    %v79 = vld [vmem:[%s1 + $0x130] sm:$0xff]
    %v80 = vld [vmem:[%s1 + $0x138] sm:$0xff]
    %v81 = vld [vmem:[%s1 + $0x140] sm:$0xff]
    %v82 = vld [vmem:[%s1 + $0x148] sm:$0xff]
    %v83 = vld [vmem:[%s1 + $0x150] sm:$0xff]
    %v84 = vld [vmem:[%s1 + $0x158] sm:$0xff]
    %v85 = vld [vmem:[%s1 + $0x160] sm:$0xff]
    %v86 = vld [vmem:[%s1 + $0x168] sm:$0xff]
    %v87 = vld [vmem:[%s1 + $0x170] sm:$0xff]
    %v88 = vld [vmem:[%s1 + $0x178] sm:$0xff]
    %89 = vmatprep.subr.mxu0 0.0
    %90 = vmatpush1.msra.mxu0 %v41
    %91 = vmatprep.subr.mxu0 0.0
    %92 = vmatpush1.msra.mxu0 %v42
    %93 = vmatprep.subr.mxu0 0.0
    %94 = vmatpush1.msra.mxu0 %v43
    %95 = vmatprep.subr.mxu0 0.0
    %96 = vmatpush1.msra.mxu0 %v44
    %97 = vmatprep.subr.mxu0 0.0
    %98 = vmatpush1.msra.mxu0 %v45
    %99 = vmatprep.subr.mxu0 0.0
    %100 = vmatpush1.msra.mxu0 %v46
    %101 = vmatprep.subr.mxu0 0.0
    %102 = vmatpush1.msra.mxu0 %v47
    %103 = vmatprep.subr.mxu0 0.0
    %104 = vmatpush1.msra.mxu0 %v48
    %105 = vmatprep.subr.mxu0 0.0
    %106 = vmatpush1.msra.mxu0 %v49
    %107 = vmatprep.subr.mxu0 0.0
    %108 = vmatpush1.msra.mxu0 %v50
    %109 = vmatprep.subr.mxu0 0.0
    %110 = vmatpush1.msra.mxu0 %v51
    %111 = vmatprep.subr.mxu0 0.0
    %112 = vmatpush1.msra.mxu0 %v52
    %113 = vmatprep.subr.mxu0 0.0
    %114 = vmatpush1.msra.mxu0 %v53
    %115 = vmatprep.subr.mxu0 0.0
    %116 = vmatpush1.msra.mxu0 %v54
    %117 = vmatprep.subr.mxu0 0.0
    %118 = vmatpush1.msra.mxu0 %v55
    %119 = vmatprep.subr.mxu0 0.0
    %120 = vmatpush1.msra.mxu0 %v56
    %121 = vmatprep.subr.mxu0 0.0
    %122 = vmatpush1.msra.mxu0 %v57
    %123 = vmatprep.subr.mxu0 0.0
    %124 = vmatpush1.msra.mxu0 %v58
    %125 = vmatprep.subr.mxu0 0.0
    %126 = vmatpush1.msra.mxu0 %v59
    %127 = vmatprep.subr.mxu0 0.0
    %128 = vmatpush1.msra.mxu0 %v60
    %129 = vmatprep.subr.mxu0 0.0
    %130 = vmatpush1.msra.mxu0 %v61
    %131 = vmatprep.subr.mxu0 0.0
    %132 = vmatpush1.msra.mxu0 %v62
    %133 = vmatprep.subr.mxu0 0.0
    %134 = vmatpush1.msra.mxu0 %v63
    %135 = vmatprep.subr.mxu0 0.0
    %136 = vmatpush1.msra.mxu0 %v64
    %137 = vmatprep.subr.mxu0 0.0
    %138 = vmatpush1.msra.mxu0 %v65
    %139 = vmatprep.subr.mxu0 0.0
    %140 = vmatpush1.msra.mxu0 %v66
    %141 = vmatprep.subr.mxu0 0.0
    %142 = vmatpush1.msra.mxu0 %v67
    %143 = vmatprep.subr.mxu0 0.0
    %144 = vmatpush1.msra.mxu0 %v68
    %145 = vmatprep.subr.mxu0 0.0
    %146 = vmatpush1.msra.mxu0 %v69
    %147 = vmatprep.subr.mxu0 0.0
    %148 = vmatpush1.msra.mxu0 %v70
    %149 = vmatprep.subr.mxu0 0.0
    %150 = vmatpush1.msra.mxu0 %v71
    %151 = vmatprep.subr.mxu0 0.0
    %152 = vmatpush1.msra.mxu0 %v72
    %153 = vmatprep.mubr.f32.mxu0 %v36
    %154 = vmatmul.mubr.f32.gmra.mrb[0].mxu0 %v35
    %v155 = vpop.f32.mrb[0].mxu0
    %v156 = vadd.f32 0.0, %v155
    %v157 = vpop.f32.mrb[0].mxu0
    %158 = vmatprep.mubr.f32.mxu0 %v39
    %159 = vmatmul.mubr.f32.gmra.mrb[0].mxu0 %v38
    %v160 = vpop.f32.mrb[0].mxu0
    %v161 = vadd.f32 0.0, %v160
    %v162 = vpop.f32.mrb[0].mxu0
    %163 = vdwg.mxu0
    %164 = vmatprep.subr.mxu0 0.0
    %165 = vmatpush1.msra.mxu0 %v73
    %166 = vmatprep.subr.mxu0 0.0
    %167 = vmatpush1.msra.mxu0 %v74
    %168 = vmatprep.subr.mxu0 0.0
    %169 = vmatpush1.msra.mxu0 %v75
    %170 = vmatprep.subr.mxu0 0.0
    %171 = vmatpush1.msra.mxu0 %v76
    %172 = vmatprep.subr.mxu0 0.0
    %173 = vmatpush1.msra.mxu0 %v77
    %174 = vmatprep.subr.mxu0 0.0
    %175 = vmatpush1.msra.mxu0 %v78
    %176 = vmatprep.subr.mxu0 0.0
    %177 = vmatpush1.msra.mxu0 %v79
    %178 = vmatprep.subr.mxu0 0.0
    %179 = vmatpush1.msra.mxu0 %v80
    %180 = vmatprep.subr.mxu0 0.0
    %181 = vmatpush1.msra.mxu0 %v81
    %182 = vmatprep.subr.mxu0 0.0
    %183 = vmatpush1.msra.mxu0 %v82
    %184 = vmatprep.subr.mxu0 0.0
    %185 = vmatpush1.msra.mxu0 %v83
    %186 = vmatprep.subr.mxu0 0.0
    %187 = vmatpush1.msra.mxu0 %v84
    %188 = vmatprep.subr.mxu0 0.0
    %189 = vmatpush1.msra.mxu0 %v85
    %190 = vmatprep.subr.mxu0 0.0
    %191 = vmatpush1.msra.mxu0 %v86
    %192 = vmatprep.subr.mxu0 0.0
    %193 = vmatpush1.msra.mxu0 %v87
    %194 = vmatprep.subr.mxu0 0.0
    %195 = vmatpush1.msra.mxu0 %v88
    %196 = vmatprep.subr.mxu0 0.0
    %197 = vmatpush1.msra.mxu0 0.0
    %198 = vmatprep.subr.mxu0 0.0
    %199 = vmatpush1.msra.mxu0 0.0
    %200 = vmatprep.subr.mxu0 0.0
    %201 = vmatpush1.msra.mxu0 0.0
    %202 = vmatprep.subr.mxu0 0.0
    %203 = vmatpush1.msra.mxu0 0.0
    %204 = vmatprep.subr.mxu0 0.0
    %205 = vmatpush1.msra.mxu0 0.0
    %206 = vmatprep.subr.mxu0 0.0
    %207 = vmatpush1.msra.mxu0 0.0
    %208 = vmatprep.subr.mxu0 0.0
    %209 = vmatpush1.msra.mxu0 0.0
    %210 = vmatprep.subr.mxu0 0.0
    %211 = vmatpush1.msra.mxu0 0.0
    %212 = vmatprep.subr.mxu0 0.0
    %213 = vmatpush1.msra.mxu0 0.0
    %214 = vmatprep.subr.mxu0 0.0
    %215 = vmatpush1.msra.mxu0 0.0
    %216 = vmatprep.subr.mxu0 0.0
    %217 = vmatpush1.msra.mxu0 0.0
    %218 = vmatprep.subr.mxu0 0.0
    %219 = vmatpush1.msra.mxu0 0.0
    %220 = vmatprep.subr.mxu0 0.0
    %221 = vmatpush1.msra.mxu0 0.0
    %222 = vmatprep.subr.mxu0 0.0
    %223 = vmatpush1.msra.mxu0 0.0
    %224 = vmatprep.subr.mxu0 0.0
    %225 = vmatpush1.msra.mxu0 0.0
    %226 = vmatprep.subr.mxu0 0.0
    %227 = vmatpush1.msra.mxu0 0.0
    %228 = vmatprep.mubr.f32.mxu0 0.0
    %229 = vmatmul.mubr.f32.gmra.mrb[0].mxu0 %v37
    %v230 = vpop.f32.mrb[0].mxu0
    %v231 = vadd.f32 %v156, %v230
    %v232 = vpop.f32.mrb[0].mxu0
    %233 = vmatprep.mubr.f32.mxu0 0.0
    %234 = vmatmul.mubr.f32.gmra.mrb[0].mxu0 %v40
    %v235 = vpop.f32.mrb[0].mxu0
    %v236 = vadd.f32 %v161, %v235
    %v237 = vpop.f32.mrb[0].mxu0
    %238 = vdwg.mxu0
    %v239 = vld [vmem:[%s2] sm:$0x1]
    %v240 = vld [vmem:[%s3] sm:$0x1]
    %vm241 = vcmask 261120
    %v242 = vsel %vm241, %v231, 0.0
    %243 = vadd.xlane.f32.xlu0 %v242
    %v244 = vpop.xlane.xlu0 %243
    %v245 = vsel %vm241, %v236, 0.0
    %246 = vadd.xlane.f32.xlu0 %v245
    %v247 = vpop.xlane.xlu0 %246
    %v248 = vrcp.pop 32.0
    %v249 = vmul.f32 %v244, %v248
    %v250 = vmul.f32 %v247, %v248
    %v251 = vsub.f32 %v231, %v249
    %v252 = vsub.f32 %v236, %v250
    %v253 = vmul.f32 %v251, %v251
    %v254 = vmul.f32 %v252, %v252
    %v255 = vsel %vm241, %v253, 0.0
    %256 = vadd.xlane.f32.xlu0 %v255
    %v257 = vpop.xlane.xlu0 %256
    %v258 = vsel %vm241, %v254, 0.0
    %259 = vadd.xlane.f32.xlu0 %v258
    %v260 = vpop.xlane.xlu0 %259
    %v261 = vmul.f32 %v257, %v248
    %v262 = vmul.f32 %v260, %v248
    %v263 = vadd.f32 %v261, 1e-05
    %v264 = vadd.f32 %v262, 1e-05
    %v265 = vrsqrt.pop %v263
    %v266 = vrsqrt.pop %v264
    %v267 = vmul.f32 %v251, %v265
    %v268 = vmul.f32 %v252, %v266
    %v270 = vlaneseq
    %v271 = vshrl.u32 %v270, 7
    %v272 = vsub.s32 0, %v271
    %v273 = vrot.slane %v239, %v272
    %v275 = vmul.f32 %v267, %v273
    %v276 = vmul.f32 %v268, %v273
    %v278 = vlaneseq
    %v279 = vshrl.u32 %v278, 7
    %v280 = vsub.s32 0, %v279
    %v281 = vrot.slane %v240, %v280
    %v283 = vadd.f32 %v275, %v281
    %v284 = vadd.f32 %v276, %v281
    %v285 = vmax.f32 %v283, 0.0
    %v286 = vmax.f32 %v284, 0.0
    %v287 = vld [vmem:[%s4] sm:$0xff]
    %v288 = vld [vmem:[%s4 + $0x8] sm:$0xff]
    %v289 = vld [vmem:[%s4 + $0x10] sm:$0xff]
    %v290 = vld [vmem:[%s4 + $0x18] sm:$0xff]
    %v292 = vsel %vm241, %v285, 0
    %v295 = vsel %vm241, %v286, 0
    %297 = vmatprep.subr.mxu0 0.0
    %298 = vmatpush1.msra.mxu0 %v287
    %299 = vmatprep.subr.mxu0 0.0
    %300 = vmatpush1.msra.mxu0 %v288
    %301 = vmatprep.subr.mxu0 0.0
    %302 = vmatpush1.msra.mxu0 %v289
    %303 = vmatprep.subr.mxu0 0.0
    %304 = vmatpush1.msra.mxu0 %v290
    %305 = vmatprep.subr.mxu0 0.0
    %306 = vmatpush1.msra.mxu0 0.0
    %307 = vmatprep.subr.mxu0 0.0
    %308 = vmatpush1.msra.mxu0 0.0
    %309 = vmatprep.subr.mxu0 0.0
    %310 = vmatpush1.msra.mxu0 0.0
    %311 = vmatprep.subr.mxu0 0.0
    %312 = vmatpush1.msra.mxu0 0.0
    %313 = vmatprep.subr.mxu0 0.0
    %314 = vmatpush1.msra.mxu0 0.0
    %315 = vmatprep.subr.mxu0 0.0
    %316 = vmatpush1.msra.mxu0 0.0
    %317 = vmatprep.subr.mxu0 0.0
    %318 = vmatpush1.msra.mxu0 0.0
    %319 = vmatprep.subr.mxu0 0.0
    %320 = vmatpush1.msra.mxu0 0.0
    %321 = vmatprep.subr.mxu0 0.0
    %322 = vmatpush1.msra.mxu0 0.0
    %323 = vmatprep.subr.mxu0 0.0
    %324 = vmatpush1.msra.mxu0 0.0
    %325 = vmatprep.subr.mxu0 0.0
    %326 = vmatpush1.msra.mxu0 0.0
    %327 = vmatprep.subr.mxu0 0.0
    %328 = vmatpush1.msra.mxu0 0.0
    %329 = vmatprep.subr.mxu0 0.0
    %330 = vmatpush1.msra.mxu0 0.0
    %331 = vmatprep.subr.mxu0 0.0
    %332 = vmatpush1.msra.mxu0 0.0
    %333 = vmatprep.subr.mxu0 0.0
    %334 = vmatpush1.msra.mxu0 0.0
    %335 = vmatprep.subr.mxu0 0.0
    %336 = vmatpush1.msra.mxu0 0.0
    %337 = vmatprep.subr.mxu0 0.0
    %338 = vmatpush1.msra.mxu0 0.0
    %339 = vmatprep.subr.mxu0 0.0
    %340 = vmatpush1.msra.mxu0 0.0
    %341 = vmatprep.subr.mxu0 0.0
    %342 = vmatpush1.msra.mxu0 0.0
    %343 = vmatprep.subr.mxu0 0.0
    %344 = vmatpush1.msra.mxu0 0.0
    %345 = vmatprep.subr.mxu0 0.0
    %346 = vmatpush1.msra.mxu0 0.0
    %347 = vmatprep.subr.mxu0 0.0
    %348 = vmatpush1.msra.mxu0 0.0
    %349 = vmatprep.subr.mxu0 0.0
    %350 = vmatpush1.msra.mxu0 0.0
    %351 = vmatprep.subr.mxu0 0.0
    %352 = vmatpush1.msra.mxu0 0.0
    %353 = vmatprep.subr.mxu0 0.0
    %354 = vmatpush1.msra.mxu0 0.0
    %355 = vmatprep.subr.mxu0 0.0
    %356 = vmatpush1.msra.mxu0 0.0
    %357 = vmatprep.subr.mxu0 0.0
    %358 = vmatpush1.msra.mxu0 0.0
    %359 = vmatprep.subr.mxu0 0.0
    %360 = vmatpush1.msra.mxu0 0.0
    %361 = vmatprep.mubr.f32.mxu0 0.0
    %362 = vmatmul.mubr.f32.gmra.mrb[0].mxu0 %v292
    %v363 = vpop.f32.mrb[0].mxu0
    %v364 = vadd.f32 0.0, %v363
    %v365 = vpop.f32.mrb[0].mxu0
    %366 = vmatprep.mubr.f32.mxu0 0.0
    %367 = vmatmul.mubr.f32.gmra.mrb[0].mxu0 %v295
    %v368 = vpop.f32.mrb[0].mxu0
    %v369 = vadd.f32 0.0, %v368
    %v370 = vpop.f32.mrb[0].mxu0
    %371 = vdwg.mxu0
    %v372 = vld [vmem:[%s5] sm:$0x1]
    %v373 = vld [vmem:[%s6] sm:$0x1]
    %v374 = vsel %vm241, %v364, 0.0
    %375 = vadd.xlane.f32.xlu0 %v374
    %v376 = vpop.xlane.xlu0 %375
    %v377 = vsel %vm241, %v369, 0.0
    %378 = vadd.xlane.f32.xlu0 %v377
    %v379 = vpop.xlane.xlu0 %378
    %v380 = vmul.f32 %v376, %v248
    %v381 = vmul.f32 %v379, %v248
    %v382 = vsub.f32 %v364, %v380
    %v383 = vsub.f32 %v369, %v381
    %v384 = vmul.f32 %v382, %v382
    %v385 = vmul.f32 %v383, %v383
    %v386 = vsel %vm241, %v384, 0.0
    %387 = vadd.xlane.f32.xlu0 %v386
    %v388 = vpop.xlane.xlu0 %387
    %v389 = vsel %vm241, %v385, 0.0
    %390 = vadd.xlane.f32.xlu0 %v389
    %v391 = vpop.xlane.xlu0 %390
    %v392 = vmul.f32 %v388, %v248
    %v393 = vmul.f32 %v391, %v248
    %v394 = vadd.f32 %v392, 1e-05
    %v395 = vadd.f32 %v393, 1e-05
    %v396 = vrsqrt.pop %v394
    %v397 = vrsqrt.pop %v395
    %v398 = vmul.f32 %v382, %v396
    %v399 = vmul.f32 %v383, %v397
    %v401 = vlaneseq
    %v402 = vshrl.u32 %v401, 7
    %v403 = vsub.s32 0, %v402
    %v404 = vrot.slane %v372, %v403
    %v406 = vmul.f32 %v398, %v404
    %v407 = vmul.f32 %v399, %v404
    %v409 = vlaneseq
    %v410 = vshrl.u32 %v409, 7
    %v411 = vsub.s32 0, %v410
    %v412 = vrot.slane %v373, %v411
    %v414 = vadd.f32 %v406, %v412
    %v415 = vadd.f32 %v407, %v412
    %v416 = vmax.f32 %v414, 0.0
    %v417 = vmax.f32 %v415, 0.0
    %v418 = vld [vmem:[%s7] sm:$0x1]
    %v420 = vlaneseq
    %v421 = vshrl.u32 %v420, 7
    %v422 = vsub.s32 0, %v421
    %v423 = vrot.slane %v418, %v422
    %v425 = vmul.f32 %v416, %v423
    %v426 = vmul.f32 %v417, %v423
    %v427 = vsel %vm241, %v425, 0.0
    %428 = vadd.xlane.f32.xlu0 %v427
    %v429 = vpop.xlane.xlu0 %428
    %v430 = vsel %vm241, %v426, 0.0
    %431 = vadd.xlane.f32.xlu0 %v430
    %v432 = vpop.xlane.xlu0 %431
    %v433 = vld [vmem:[#allocation2] sm:$0x1]
    %435 = vset.pattern.permute.xlu0 0
    %436 = vperm.xlu0 %435, %v433
    %v437 = vpop.permute.xlu0 %436
    %v439 = vlaneseq
    %v440 = vshrl.u32 %v439, 7
    %v441 = vsub.s32 0, %v440
    %v442 = vrot.slane %v437, %v441
    %v443 = vadd.f32 %v429, %v442
    %v444 = vadd.f32 %v432, %v442
    %v447 = vlaneseq
    %v448 = vand.u32 %v447, 127
    %v449 = vlaneseq
    %v450 = vshrl.u32 %v449, 7
    %v451 = vsub.s32 %v448, %v450
    %v452 = vrot.slane %v443, %v451
    %v453 = vadd.s32 %v448, 4294967288
    %v454 = vlaneseq
    %v455 = vshrl.u32 %v454, 7
    %v456 = vsub.s32 %v453, %v455
    %v457 = vrot.slane %v444, %v456
    %vm458 = vcmask 130112
    %v459 = vsel %vm458, %v457, %v452
    %vm461 = vcmask 122880
    %462 = vst.msk [vmem:[#allocation3] sm:$0x1] %vm461, %v459
    // Predicated region
    $region38: #{tpu_custom_call.1} parent=1 // pred_check
      _
    $region39: #{tpu_custom_call.1} parent=1 // pred_check_branch
      %464 = sbr.rel (0) target = $region41
    $region40: #{tpu_custom_call.1} parent=1 // pred_region
      %s466 = ssub.s32 16, 16
      %467 = vsyncadd [#allocation4], %s466
      %s469 = sshll.u32 [#allocation3], 4
      %s470 = int_to_ptr.vmem [resolvable:$true] %s469
      %472 = dma.vmem_to_hbm [thread:$0]  %s470, 16, %s9, [#allocation4]
    $region41: #{tpu_custom_call.1} parent=1 // pred_fallthru
      _
    // Predicated region
    $region42: #{tpu_custom_call.1} parent=1 // pred_check
      _
    $region43: #{tpu_custom_call.1} parent=1 // pred_check_branch
      %474 = sbr.rel (0) target = $region45
    $region44: #{tpu_custom_call.1} parent=1 // pred_region
      %475 = dma.done [#allocation4], 16
    $region45: #{tpu_custom_call.1} parent=1 // pred_fallthru
      _
    %476 = vsyncpa [#allocation4], 1

</llo_original>
